<compile_context>
chip_gen: v7x
topology: tpu7x:2x2x1
jax: 0.10.0
libtpu: 0.0.40
codegen_flags: <defaults>
</compile_context>

<pallas_src>
import math

import jax
import jax.numpy as jnp
from jax.experimental import pallas as pl
from jax.experimental.pallas import tpu as pltpu

_LANE = 128
_SUBLANE_32BIT = 8

# Conservative defaults, safe on v5e/v6e/v7x; refined per chip in _chip_tuning.
_DEFAULT_TILE_BYTES = 8 << 20
_DEFAULT_VMEM_LIMIT = 32 << 20

# Pack rows into lane-dense super-rows only when a single output row is this
# narrow; for wider rows the masked-vst fill already far exceeds HBM write BW.
_PACK_ROW_BYTES_MAX = 512


def _round_up(a: int, b: int) -> int:
    return pl.cdiv(a, b) * b


def _chip_tuning():
    """Returns (target_tile_bytes, vmem_limit_bytes) for the local TPU."""
    try:
        vmem_cap = pltpu.get_tpu_info().vmem_capacity_bytes
    except Exception:
        return _DEFAULT_TILE_BYTES, _DEFAULT_VMEM_LIMIT
    if vmem_cap <= (64 << 20):
        # v7x-class: 64 MiB VMEM/TC but ~3.2 TB/s HBM write BW -> larger tiles
        # so per-grid-step overhead stays small; 2x16 MiB + const fits easily.
        return 16 << 20, 48 << 20
    # v5e / v6e (128 MiB VMEM): 8 MiB tiles already amortize per-step overhead
    # to a few percent; larger tiles buy nothing on these generations.
    return _DEFAULT_TILE_BYTES, _DEFAULT_VMEM_LIMIT


def _broadcast_const_kernel(const_ref, out_ref):
    # const_ref: [1, width] tile whose block index is identical at every grid
    # step, so Pallas DMAs it from HBM once and keeps it VMEM-resident.
    # out_ref: [tile_rows, width] output tile.  The sublane broadcast + store
    # fill hides under the output HBM writeback DMA (the binding resource).
    out_ref[...] = jnp.broadcast_to(const_ref[...], out_ref.shape)


def trainable_constant_net(x: jax.Array,
                           trainable_const: jax.Array,
                           *,
                           min_kernel_bytes: int = 4 << 20,
                           target_tile_bytes: int | None = None,
                           vmem_limit_bytes: int | None = None) -> jax.Array:
    """Replicates TrainableConstantNet.forward: returns const repeated n times."""
    assert x.ndim == 2
    assert trainable_const.ndim == 1
    n = x.shape[0]
    d = trainable_const.shape[0]
    dtype = trainable_const.dtype
    itemsize = jnp.dtype(dtype).itemsize

    # Tiny outputs: kernel launch + per-step overhead dwarfs the work.
    if n * d * itemsize < min_kernel_bytes:
        return jnp.broadcast_to(trainable_const[None, :], (n, d))

    tuned_tile, tuned_vmem = _chip_tuning()
    tile_bytes = tuned_tile if target_tile_bytes is None else target_tile_bytes
    vmem_limit = tuned_vmem if vmem_limit_bytes is None else vmem_limit_bytes

    # dtype-aware packed sublane count (8 rows f32, 16 bf16, 32 int8).
    sub = max(_SUBLANE_32BIT, (_SUBLANE_32BIT * 4) // itemsize)

    # ---- Lane-dense packing (only when it never forces a wrapper-side slice)
    r = _LANE // math.gcd(d, _LANE)
    if r > 1 and ((n % r != 0)
                  or (d * itemsize >= _PACK_ROW_BYTES_MAX)
                  or (d * r * itemsize > tile_bytes)):
        r = 1
    rows = n // r
    width = d * r

    if r > 1:
        # One-time tiny XLA op: replicate the constant into one super-row.
        const_slab = jnp.tile(trainable_const, r).reshape(1, width)
    else:
        const_slab = trainable_const.reshape(1, d)

    # ---- Balanced row tiling with a ragged last block (no padded writes) ----
    bytes_per_row = width * itemsize
    cap_rows = max(sub, (tile_bytes // bytes_per_row) // sub * sub)
    if rows <= cap_rows:
        tile_rows = rows  # single full-extent block (always a legal block dim)
    else:
        num_tiles = pl.cdiv(rows, cap_rows)
        tile_rows = _round_up(pl.cdiv(rows, num_tiles), sub)
    grid = (pl.cdiv(rows, tile_rows),)

    out_packed = pl.pallas_call(
        _broadcast_const_kernel,
        out_shape=jax.ShapeDtypeStruct((rows, width), dtype),
        grid_spec=pltpu.PrefetchScalarGridSpec(
            num_scalar_prefetch=0,
            grid=grid,
            in_specs=[
                # Same [1, width] constant tile for every grid step.
                pl.BlockSpec((1, width), lambda i: (0, 0)),
            ],
            out_specs=pl.BlockSpec((tile_rows, width), lambda i: (i, 0)),
        ),
        compiler_params=pltpu.CompilerParams(
            # Disjoint output row tiles per step -> parallel (lets v7x split
            # the row grid across its 2 TensorCores; no-op on v5e/v6e).
            dimension_semantics=("parallel",),
            vmem_limit_bytes=vmem_limit,
        ),
        cost_estimate=pl.CostEstimate(
            flops=0,
            transcendentals=0,
            bytes_accessed=rows * width * itemsize + width * itemsize,
        ),
    )(const_slab)

    if r > 1:
        # Row-major view back to [n, d]; no slice, no copy.
        return out_packed.reshape(n, d)
    return out_packed


if __name__ == "__main__":
    key = jax.random.PRNGKey(0)
    k_x, k_c, k_x2, k_c2, k_x3, k_c3 = jax.random.split(key, 6)

    # 1) Small shape matching the module spec (n=8 rows, hidden d=32), forced
    #    through the Pallas kernel (exercises the lane-dense packed path).
    n, in_feat, d = 8, 16, 32
    x = jax.random.normal(k_x, (n, in_feat), dtype=jnp.float32)
    trainable_const = jax.random.normal(k_c, (d,), dtype=jnp.float32)
    out = jax.block_until_ready(
        trainable_constant_net(x, trainable_const, min_kernel_bytes=0))
    ref = jnp.broadcast_to(trainable_const[None, :], (n, d))
    assert out.shape == (n, d)
    assert out.dtype == trainable_const.dtype
    assert jnp.array_equal(out, ref)

    # 2) n not a multiple of the packing factor, d not a multiple of 128 ->
    #    unpacked path with full-row blocks and direct (n, d) output (no slice).
    n2, d2 = 4103, 96
    x2 = jax.random.normal(k_x2, (n2, 4), dtype=jnp.float32)
    const2 = jax.random.normal(k_c2, (d2,), dtype=jnp.float32)
    out2 = jax.block_until_ready(
        trainable_constant_net(x2, const2, min_kernel_bytes=0))
    ref2 = jnp.broadcast_to(const2[None, :], (n2, d2))
    assert out2.shape == (n2, d2)
    assert jnp.array_equal(out2, ref2)

    # 3) Packed path with a multi-step ragged grid (small target tile forces
    #    several tiles + a clipped last block) -> checks no padded rows leak.
    n3, d3 = 4100, 96
    x3 = jax.random.normal(k_x3, (n3, 4), dtype=jnp.float32)
    const3 = jax.random.normal(k_c3, (d3,), dtype=jnp.float32)
    out3 = jax.block_until_ready(
        trainable_constant_net(x3, const3, min_kernel_bytes=0,
                               target_tile_bytes=96 * 1024))
    ref3 = jnp.broadcast_to(const3[None, :], (n3, d3))
    assert out3.shape == (n3, d3)
    assert jnp.array_equal(out3, ref3)

    print("KERNEL_OK")
</pallas_src>

<mosaic_0001>
module attributes {stable_mosaic.version = 11 : i64} {
  func.func @_broadcast_const_kernel(%arg0: i32, %arg1: memref<1x128xf32, #tpu.memory_space<vmem>>, %arg2: memref<2x128xf32, #tpu.memory_space<vmem>>) attributes {dimension_semantics = [#tpu.dimension_semantics<parallel>], iteration_bounds = array<i64: 1>, scalar_prefetch = 0 : i64, scratch_operands = 0 : i64, tpu.core_type = #tpu.core_type<tc>, window_params = [{pipeline_mode = #tpu.pipeline_mode<synchronous>, transform_indices = @transform_0, window_bounds = array<i64: 1, 128>}, {transform_indices = @transform_1, window_bounds = array<i64: 2, 128>}]} {
    %c0 = arith.constant 0 : index
    %c0_0 = arith.constant 0 : index
    %0 = vector.load %arg1[%c0, %c0_0] : memref<1x128xf32, #tpu.memory_space<vmem>>, vector<1x128xf32>
    %1 = vector.shape_cast %0 : vector<1x128xf32> to vector<1x128xf32>
    %2 = vector.broadcast %1 : vector<1x128xf32> to vector<2x128xf32>
    %c0_1 = arith.constant 0 : index
    %c0_2 = arith.constant 0 : index
    %3 = vector.load %arg2[%c0_1, %c0_2] : memref<2x128xf32, #tpu.memory_space<vmem>>, vector<2x128xf32>
    tpu.vector_store %arg2[%c0_1, %c0_2], %2 {strides = array<i32>} : memref<2x128xf32, #tpu.memory_space<vmem>>, vector<2x128xf32>,
    return
  }
  func.func @transform_0(%arg0: i32) -> (i32, i32) {
    %c0_i32 = arith.constant 0 : i32
    %c0_i32_0 = arith.constant 0 : i32
    %c0_i32_1 = arith.constant 0 : i32
    return %c0_i32, %c0_i32_0 : i32, i32
  }
  func.func @transform_1(%arg0: i32) -> (i32, i32) {
    %c0_i32 = arith.constant 0 : i32
    %c0_i32_0 = arith.constant 0 : i32
    return %arg0, %c0_i32 : i32, i32
  }
}

</mosaic_0001>

<llo_original>
// kernel: tpu_custom_call.1
$region0: #{tpu_custom_call.1}
  #allocation0 [shape = 'u32[]', space=smem, size = 0x4, offset = 0x4, fixed_abs, tag = 'smem constant byte address 0x4 - core index']
  #allocation1 [shape = 'u32[144,128]{1,0:T(1,128)}', space=vmem, size = 0x12000, scoped, tag = 'internal scratch']
  %s0 = inlined_call_operand.hbm [shape: f32[1,128], index: 0, kind: input, shape index: {}]
  %s1 = inlined_call_operand.hbm [shape: f32[2,128], index: 1, kind: output, shape index: {}]
  %s2 = sld [smem:[#allocation0]]
  $region18: #{tpu_custom_call.1} parent=0
    _
  %s4 = ssub.s32 1, %s2
  %s5 = scalar_select 0, %s4, %s2
  $region1: #{tpu_custom_call.1} parent=0
    #allocation2 [shape = 'u8[512]{0}', space=vmem, size = 0x400, scoped, tag = 'input window, operand 0, single buffered']
    #allocation3 [shape = 's32[1]{0}', space=sflag, size = 0x4, scoped, tag = 'scoped memory for tpu_custom_call.1']
    #allocation4 [shape = 's32[1]{0}', space=sflag, size = 0x4, scoped, tag = 'scoped memory for tpu_custom_call.1']
    #allocation5 [shape = 'u8[1024]{0}', space=vmem, size = 0x400, scoped, tag = 'output window, operand 0, single buffered']
    %6 = vsyncpa [#allocation3], 0
    %7 = vsyncpa [#allocation4], 0
    // Predicated region
    $region2: #{tpu_custom_call.1} parent=1 // pred_check
      _
    $region3: #{tpu_custom_call.1} parent=1 // pred_check_branch
      %9 = sbr.rel (0) target = $region5
    $region4: #{tpu_custom_call.1} parent=1 // pred_region
      %s11 = ssub.s32 16, 16
      %12 = vsyncadd [#allocation3], %s11
      %s14 = sshll.u32 [#allocation2], 4
      %s15 = int_to_ptr.vmem [resolvable:$true] %s14
      %17 = dma.hbm_to_vmem [thread:$0]  %s0, 16, %s15, [#allocation3]
    $region5: #{tpu_custom_call.1} parent=1 // pred_fallthru
      _
    // Predicated region
    $region6: #{tpu_custom_call.1} parent=1 // pred_check
      _
    $region7: #{tpu_custom_call.1} parent=1 // pred_check_branch
      %19 = sbr.rel (0) target = $region9
    $region8: #{tpu_custom_call.1} parent=1 // pred_region
      %20 = dma.done [#allocation3], 16
    $region9: #{tpu_custom_call.1} parent=1 // pred_fallthru
      _
    %v21 = vld [vmem:[#allocation2] sm:$0x1]
    %v23 = vlaneseq
    %v24 = vshrl.u32 %v23, 7
    %v25 = vsub.s32 0, %v24
    %v26 = vrot.slane %v21, %v25
    %28 = vst [vmem:[#allocation5] sm:$0x3] %v26
    // Predicated region
    $region10: #{tpu_custom_call.1} parent=1 // pred_check
      _
    $region11: #{tpu_custom_call.1} parent=1 // pred_check_branch
      %30 = sbr.rel (0) target = $region13
    $region12: #{tpu_custom_call.1} parent=1 // pred_region
      %s32 = ssub.s32 32, 32
      %33 = vsyncadd [#allocation4], %s32
      %s35 = sshll.u32 [#allocation5], 4
      %s36 = int_to_ptr.vmem [resolvable:$true] %s35
      %38 = dma.vmem_to_hbm [thread:$0]  %s36, 32, %s1, [#allocation4]
    $region13: #{tpu_custom_call.1} parent=1 // pred_fallthru
      _
    // Predicated region
    $region14: #{tpu_custom_call.1} parent=1 // pred_check
      _
    $region15: #{tpu_custom_call.1} parent=1 // pred_check_branch
      %40 = sbr.rel (0) target = $region17
    $region16: #{tpu_custom_call.1} parent=1 // pred_region
      %41 = dma.done [#allocation4], 32
    $region17: #{tpu_custom_call.1} parent=1 // pred_fallthru
      _
    %42 = vsyncpa [#allocation3], 1
    %43 = vsyncpa [#allocation4], 1

</llo_original>
